<compile_context>
chip_gen: v7x
topology: tpu7x:2x2x1
jax: 0.10.0
libtpu: 0.0.40
codegen_flags: <defaults>
</compile_context>

<pallas_src>
import functools

import jax
import jax.numpy as jnp
from jax.experimental import pallas as pl
from jax.experimental.pallas import tpu as pltpu


def _swish_kernel(x_ref, o_ref, *, beta):
    x = x_ref[...]
    xf = x.astype(jnp.float32)
    # swish = x / (1 + e^{-beta x}); exp goes to EUP, the rest is cheap VPU work.
    y = xf / (1.0 + jnp.exp(-beta * xf))
    o_ref[...] = y.astype(o_ref.dtype)


def swish(x: jax.Array, beta: float = 1.0, *,
          target_block_bytes: int = 2 * 1024 * 1024) -> jax.Array:
    """Swish over an arbitrarily-shaped array (NCHW in the test harness)."""
    orig_shape = x.shape
    orig_dtype = x.dtype
    n = x.size
    if n == 0:
        return x

    LANE = 128
    flat = x.reshape(-1)

    # Pad only to a multiple of 128 lanes (only when the size demands it).
    pad = (-n) % LANE
    if pad:
        flat = jnp.pad(flat, (0, pad))
    total = flat.size

    # Widest lane width (multiple of 128) dividing the length -> lane-dense
    # output slab, unmasked full-width `vst`s.
    lanes = LANE
    for cand in (4096, 2048, 1024, 512, 256):
        if total % cand == 0:
            lanes = cand
            break
    rows = total // lanes
    x2d = flat.reshape(rows, lanes)

    itemsize = jnp.dtype(orig_dtype).itemsize
    block_rows_target = max(1, target_block_bytes // (lanes * itemsize))
    if block_rows_target >= rows:
        # One block covers everything (full-extent block is always legal).
        block_rows = rows
    else:
        # Sublane alignment: 8 rows for 32-bit, 16 for packed 16-bit dtypes.
        sub = 16 if itemsize < 4 else 8
        block_rows = max(sub, (block_rows_target // sub) * sub)

    grid = (pl.cdiv(rows, block_rows),)

    kernel = functools.partial(_swish_kernel, beta=float(beta))
    out2d = pl.pallas_call(
        kernel,
        out_shape=jax.ShapeDtypeStruct((rows, lanes), orig_dtype),
        grid_spec=pltpu.PrefetchScalarGridSpec(
            num_scalar_prefetch=0,
            grid=grid,
            in_specs=[pl.BlockSpec((block_rows, lanes), lambda i: (i, 0))],
            out_specs=pl.BlockSpec((block_rows, lanes), lambda i: (i, 0)),
        ),
        compiler_params=pltpu.CompilerParams(
            # "parallel" lets megacore (v7x) shard the row axis across TCs.
            dimension_semantics=("parallel",),
            # Headroom for double-buffered in+out blocks (esp. v5e's 16 MiB
            # default scoped VMEM); safely below v7x's 64 MiB physical VMEM.
            vmem_limit_bytes=32 * 1024 * 1024,
        ),
    )(x2d)

    out_flat = out2d.reshape(-1)
    if pad:
        out_flat = out_flat[:n]
    return out_flat.reshape(orig_shape)


def swish_reference(x: jax.Array, beta: float = 1.0) -> jax.Array:
    xf = x.astype(jnp.float32)
    return (xf / (1.0 + jnp.exp(-beta * xf))).astype(x.dtype)


if __name__ == "__main__":
    key = jax.random.PRNGKey(0)

    # Small harness shape: NCHW (2, 4, 16, 16) -> single-block path.
    x = jax.random.normal(key, (2, 4, 16, 16), dtype=jnp.float32) * 3.0
    out = swish(x, beta=1.0)
    jax.block_until_ready(out)
    ref = swish_reference(x, beta=1.0)
    assert out.shape == x.shape and out.dtype == x.dtype
    assert jnp.allclose(out, ref, atol=1e-5, rtol=1e-5), "mismatch vs reference (f32, beta=1)"

    # Non-128-divisible size -> minimal-pad path; non-default beta.
    k2, k3 = jax.random.split(key)
    y = jax.random.normal(k2, (3, 5, 7, 11), dtype=jnp.float32) * 2.0
    out_y = swish(y, beta=0.75)
    jax.block_until_ready(out_y)
    assert jnp.allclose(out_y, swish_reference(y, beta=0.75), atol=1e-5, rtol=1e-5), "mismatch (padded path)"

    # Larger shape -> multi-block tiled (lane-dense, pipelined) path.
    z = jax.random.normal(k3, (8, 64, 64, 64), dtype=jnp.float32)
    out_z = swish(z, beta=1.0)
    jax.block_until_ready(out_z)
    assert jnp.allclose(out_z, swish_reference(z, beta=1.0), atol=1e-5, rtol=1e-5), "mismatch (tiled path)"

    # bf16 path -> exercises in-kernel f32 compute + cast-back.
    w = jax.random.normal(key, (2, 4, 16, 16), dtype=jnp.bfloat16)
    out_w = swish(w, beta=1.0)
    jax.block_until_ready(out_w)
    assert jnp.allclose(out_w.astype(jnp.float32),
                        swish_reference(w, beta=1.0).astype(jnp.float32),
                        atol=2e-2, rtol=2e-2), "mismatch (bf16 path)"

    print("KERNEL_OK")
</pallas_src>

<mosaic_0001>
module attributes {stable_mosaic.version = 11 : i64} {
  func.func @_swish_kernel(%arg0: i32, %arg1: memref<1x2048xf32, #tpu.memory_space<vmem>>, %arg2: memref<1x2048xf32, #tpu.memory_space<vmem>>) attributes {dimension_semantics = [#tpu.dimension_semantics<parallel>], iteration_bounds = array<i64: 1>, scalar_prefetch = 0 : i64, scratch_operands = 0 : i64, tpu.core_type = #tpu.core_type<tc>, window_params = [{transform_indices = @transform_0, window_bounds = array<i64: 1, 2048>}, {transform_indices = @transform_1, window_bounds = array<i64: 1, 2048>}]} {
    %c0 = arith.constant 0 : index
    %c0_0 = arith.constant 0 : index
    %0 = vector.load %arg1[%c0, %c0_0] : memref<1x2048xf32, #tpu.memory_space<vmem>>, vector<1x2048xf32>
    %cst = arith.constant -1.000000e+00 : f32
    %1 = vector.broadcast %cst : f32 to vector<1x2048xf32>
    %2 = arith.mulf %1, %0 : vector<1x2048xf32>
    %3 = math.exp %2 : vector<1x2048xf32>
    %cst_1 = arith.constant 1.000000e+00 : f32
    %4 = vector.broadcast %cst_1 : f32 to vector<1x2048xf32>
    %5 = arith.addf %4, %3 : vector<1x2048xf32>
    %6 = arith.divf %0, %5 : vector<1x2048xf32>
    %c0_2 = arith.constant 0 : index
    %c0_3 = arith.constant 0 : index
    %7 = vector.load %arg2[%c0_2, %c0_3] : memref<1x2048xf32, #tpu.memory_space<vmem>>, vector<1x2048xf32>
    tpu.vector_store %arg2[%c0_2, %c0_3], %6 {strides = array<i32>} : memref<1x2048xf32, #tpu.memory_space<vmem>>, vector<1x2048xf32>,
    return
  }
  func.func @transform_0(%arg0: i32) -> (i32, i32) {
    %c0_i32 = arith.constant 0 : i32
    %c0_i32_0 = arith.constant 0 : i32
    return %arg0, %c0_i32 : i32, i32
  }
  func.func @transform_1(%arg0: i32) -> (i32, i32) {
    %c0_i32 = arith.constant 0 : i32
    %c0_i32_0 = arith.constant 0 : i32
    return %arg0, %c0_i32 : i32, i32
  }
}

</mosaic_0001>

<llo_original>
// kernel: tpu_custom_call.1
$region0: #{tpu_custom_call.1}
  #allocation0 [shape = 'u32[]', space=smem, size = 0x4, offset = 0x4, fixed_abs, tag = 'smem constant byte address 0x4 - core index']
  #allocation1 [shape = 'u32[144,128]{1,0:T(1,128)}', space=vmem, size = 0x12000, scoped, tag = 'internal scratch']
  %s0 = inlined_call_operand.hbm [shape: f32[1,2048], index: 0, kind: input, shape index: {}]
  %s1 = inlined_call_operand.hbm [shape: f32[1,2048], index: 1, kind: output, shape index: {}]
  %s2 = sld [smem:[#allocation0]]
  $region18: #{tpu_custom_call.1} parent=0
    _
  %s4 = ssub.s32 1, %s2
  %s5 = scalar_select 0, %s4, %s2
  $region1: #{tpu_custom_call.1} parent=0
    #allocation2 [shape = 'u8[8192]{0}', space=vmem, size = 0x2000, scoped, tag = 'input window, operand 0, single buffered']
    #allocation3 [shape = 's32[1]{0}', space=sflag, size = 0x4, scoped, tag = 'scoped memory for tpu_custom_call.1']
    #allocation4 [shape = 's32[1]{0}', space=sflag, size = 0x4, scoped, tag = 'scoped memory for tpu_custom_call.1']
    #allocation5 [shape = 'u8[8192]{0}', space=vmem, size = 0x2000, scoped, tag = 'output window, operand 0, single buffered']
    %6 = vsyncpa [#allocation3], 0
    %7 = vsyncpa [#allocation4], 0
    // Predicated region
    $region2: #{tpu_custom_call.1} parent=1 // pred_check
      _
    $region3: #{tpu_custom_call.1} parent=1 // pred_check_branch
      %9 = sbr.rel (0) target = $region5
    $region4: #{tpu_custom_call.1} parent=1 // pred_region
      %s11 = ssub.s32 256, 256
      %12 = vsyncadd [#allocation3], %s11
      %s14 = sshll.u32 [#allocation2], 4
      %s15 = int_to_ptr.vmem [resolvable:$true] %s14
      %17 = dma.hbm_to_vmem [thread:$0]  %s0, 256, %s15, [#allocation3]
    $region5: #{tpu_custom_call.1} parent=1 // pred_fallthru
      _
    // Predicated region
    $region6: #{tpu_custom_call.1} parent=1 // pred_check
      _
    $region7: #{tpu_custom_call.1} parent=1 // pred_check_branch
      %19 = sbr.rel (0) target = $region9
    $region8: #{tpu_custom_call.1} parent=1 // pred_region
      %20 = dma.done [#allocation3], 256
    $region9: #{tpu_custom_call.1} parent=1 // pred_fallthru
      _
    %v21 = vld [vmem:[#allocation2] sm:$0xff]
    %v22 = vld [vmem:[#allocation2 + $0x8] sm:$0xff]
    %v23 = vmul.f32 %v21, -1.0
    %v24 = vmul.f32 %v22, -1.0
    %v25 = vmul.f32 %v23, 1.442695
    %v26 = vpow.pop %v25
    %v27 = vmul.f32 %v24, 1.442695
    %v28 = vpow.pop %v27
    %v29 = vadd.f32 %v26, 1.0
    %v30 = vadd.f32 %v28, 1.0
    %v31 = vrcp.pop %v29
    %v32 = vmul.f32 %v21, %v31
    %v33 = vrcp.pop %v30
    %v34 = vmul.f32 %v22, %v33
    %35 = vst [vmem:[#allocation5] sm:$0xff] %v32
    %36 = vst [vmem:[#allocation5 + $0x8] sm:$0xff] %v34
    // Predicated region
    $region10: #{tpu_custom_call.1} parent=1 // pred_check
      _
    $region11: #{tpu_custom_call.1} parent=1 // pred_check_branch
      %38 = sbr.rel (0) target = $region13
    $region12: #{tpu_custom_call.1} parent=1 // pred_region
      %s40 = ssub.s32 256, 256
      %41 = vsyncadd [#allocation4], %s40
      %s43 = sshll.u32 [#allocation5], 4
      %s44 = int_to_ptr.vmem [resolvable:$true] %s43
      %46 = dma.vmem_to_hbm [thread:$0]  %s44, 256, %s1, [#allocation4]
    $region13: #{tpu_custom_call.1} parent=1 // pred_fallthru
      _
    // Predicated region
    $region14: #{tpu_custom_call.1} parent=1 // pred_check
      _
    $region15: #{tpu_custom_call.1} parent=1 // pred_check_branch
      %48 = sbr.rel (0) target = $region17
    $region16: #{tpu_custom_call.1} parent=1 // pred_region
      %49 = dma.done [#allocation4], 256
    $region17: #{tpu_custom_call.1} parent=1 // pred_fallthru
      _
    %50 = vsyncpa [#allocation3], 1
    %51 = vsyncpa [#allocation4], 1

</llo_original>
